<compile_context>
chip_gen: v7x
topology: tpu7x:2x2x1
jax: 0.10.0
libtpu: 0.0.40
codegen_flags: <defaults>
</compile_context>

<pallas_src>
import jax
import jax.numpy as jnp
from jax import lax
from jax.experimental import pallas as pl
from jax.experimental.pallas import tpu as pltpu


# ------------------------------------------------------------ chip awareness

def _physical_vmem_bytes():
    """Per-core physical VMEM, queried when possible, else a safe guess."""
    try:
        info = pltpu.get_tpu_info()
        v = getattr(info, "vmem_capacity_bytes", None)
        if v:
            return int(v)
    except Exception:
        pass
    try:
        kind = jax.devices()[0].device_kind.lower()
    except Exception:
        kind = ""
    if "v7" in kind:
        return 64 * 1024 * 1024
    if "v2" in kind or "v3" in kind:
        return 16 * 1024 * 1024
    if kind:
        return 128 * 1024 * 1024       # v4 / v5e / v5p / v6e
    return 64 * 1024 * 1024            # unknown: be conservative


def _num_tensorcores():
    """TensorCores reachable by a 'parallel' grid axis on one device."""
    try:
        kind = jax.devices()[0].device_kind.lower()
    except Exception:
        return 2
    if "v7" in kind:
        return 2                        # 2 TCs per chip
    if "lite" in kind or "v5e" in kind or "v6" in kind or "v2" in kind or "v3" in kind:
        return 1                        # single TensorCore per device
    return 2                            # v4 / v5p megacore (and unknown: harmless)


# ---------------------------------------------------------------- utilities

def _round_up(x, m):
    return ((x + m - 1) // m) * m


def _matmul(a, b, mxu_dtype):
    """(M, K) @ (K, N) -> (M, N) on the MXU, operands in mxu_dtype, f32 acc."""
    return lax.dot_general(a.astype(mxu_dtype), b.astype(mxu_dtype),
                           (((1,), (0,)), ((), ())),
                           preferred_element_type=jnp.float32)


def _softmax_rows(scores):
    """Numerically stable softmax over the last axis of a (TB, S) tile (f32)."""
    scores = scores.astype(jnp.float32)
    m = jnp.max(scores, axis=-1, keepdims=True)
    e = jnp.exp(scores - m)
    d = jnp.sum(e, axis=-1, keepdims=True)
    # EUP approximate reciprocal + one Newton-Raphson step: the divide lives on
    # the (otherwise idle) EUP slot, the refinement restores ~f32 accuracy.
    inv = pl.reciprocal(d, approx=True)
    inv = inv * (2.0 - d * inv)
    return e * inv


# ------------------------------------------------------------------ kernels
# Each grid step handles TB batch rows:
#   hidden (TB, H), encoder (TB, S, H), output (TB, S).
# Rows past B in the last partial tile compute an independent row-wise softmax
# on undefined data; their stores are masked by Pallas, so they are harmless.

def _make_dot_kernel():
    def kernel(h_ref, e_ref, o_ref):
        h = h_ref[...]                                        # (TB, H)
        enc = e_ref[...]                                      # (TB, S, H)
        scores = jnp.sum(h[:, None, :] * enc, axis=-1)        # (TB, S)  VPU + XLU
        o_ref[...] = _softmax_rows(scores).astype(o_ref.dtype)
    return kernel


def _make_general_kernel(mxu_dtype):
    def kernel(h_ref, e_ref, w_ref, b_ref, o_ref):
        h = h_ref[...]                                        # (TB, H)
        enc = e_ref[...]                                      # (TB, S, H)
        w = w_ref[...]                                        # (H, H)  (out, in)
        b = b_ref[...]                                        # (1, H)
        # score[b, s] = h[b] . (W @ enc[b, s] + bias)
        #             = (h[b] @ W) . enc[b, s] + h[b] . bias     (reassociated)
        g = _matmul(h, w, mxu_dtype)                          # (TB, H)  MXU, f32
        hb = jnp.sum(h * b, axis=-1, keepdims=True).astype(jnp.float32)  # (TB, 1)
        scores = jnp.sum(g[:, None, :] * enc, axis=-1) + hb   # (TB, S)  VPU + XLU
        o_ref[...] = _softmax_rows(scores).astype(o_ref.dtype)
    return kernel


def _make_concat_kernel(mxu_dtype):
    def kernel(h_ref, e_ref, wt_ref, b_ref, v_ref, o_ref):
        tb, hdim = h_ref.shape
        s = e_ref.shape[1]
        h = h_ref[...]                                        # (TB, H)
        enc = e_ref[...]                                      # (TB, S, H)
        wt = wt_ref[...]                                      # (2H, H) = Wa.T
        b = b_ref[...].astype(jnp.float32)                    # (1, H)
        v = v_ref[...].astype(jnp.float32)                    # (1, H)
        w1t = wt[:hdim, :]                                    # hidden part  (sublane-aligned)
        w2t = wt[hdim:, :]                                    # encoder part (sublane-aligned)
        # energy[b, s] = tanh(h[b] @ W1.T + enc[b, s] @ W2.T + bias)
        h_proj = _matmul(h, w1t, mxu_dtype)                   # (TB, H)     MXU, f32
        # NOTE: sublane-merging reshape is a free relayout when S % 8 == 0
        # (pad S to a multiple of 8 in the wrapper for ragged sequences).
        e_proj = _matmul(enc.reshape(tb * s, hdim), w2t, mxu_dtype)  # (TB*S, H)  MXU, f32
        energy = jnp.tanh(e_proj.reshape(tb, s, hdim) + h_proj[:, None, :] + b)
        scores = jnp.sum(v * energy, axis=-1)                 # (TB, S)  VPU + XLU
        o_ref[...] = _softmax_rows(scores).astype(o_ref.dtype)
    return kernel


# ------------------------------------------------------------------- tiling

def _choose_tb(batch, per_row_bytes, const_bytes, vmem_target, num_cores):
    """Batch-tile size: as many rows as the generation-aware VMEM target
    allows, sublane-aligned, with balanced >=2 grid steps on multi-TC chips."""
    avail = max(vmem_target - const_bytes, per_row_bytes)
    tb = int(max(1, avail // per_row_bytes))
    if tb >= batch:
        tb = batch
    else:
        # Keep the sublane dim of the (TB, H)/(TB, S) blocks a multiple of 8.
        # (For enormous S*H even 8 rows may exceed the target; see the
        #  TODO(synk) on S-tiling at the top of the file -- the explicit
        #  vmem_limit below is sized to cover this floor.)
        tb = max(8, (tb // 8) * 8)
    if num_cores >= 2:
        steps = -(-batch // tb)
        if steps == 1 and batch >= 16:
            # Whole batch fits in one step: split so both TensorCores work.
            tb = max(8, _round_up(-(-batch // 2), 8))
        elif steps > 1 and steps % 2 == 1:
            # Odd step count leaves a one-step imbalance across 2 cores.
            cand = max(8, _round_up(-(-batch // (steps + 1)), 8))
            if cand <= tb and (-(-batch // cand)) % 2 == 0:
                tb = cand
    return tb


# ------------------------------------------------------------------ wrapper

def luong_attention(method, hidden, encoder_output, params=None, *, mxu_bf16=True):
    """Pallas implementation of LuongAttention.forward.

    hidden: (B, 1, H), encoder_output: (B, S, H) -> (B, 1, S) attention weights.
    mxu_bf16: cast MXU operands to bf16 (f32 accumulation) for general/concat.
    """
    if method not in ('dot', 'general', 'concat'):
        raise ValueError(method, 'is not an appropriate attention method.')

    B, _, H = hidden.shape
    _, S, _ = encoder_output.shape

    in_dtype = jnp.result_type(hidden.dtype, encoder_output.dtype)
    out_dtype = in_dtype                       # softmax weights follow activations
    mxu_dtype = jnp.bfloat16 if mxu_bf16 else in_dtype
    itemsize = jnp.dtype(in_dtype).itemsize
    out_item = jnp.dtype(out_dtype).itemsize

    h2 = hidden.reshape(B, H).astype(in_dtype)
    enc = encoder_output.astype(in_dtype)

    physical_vmem = _physical_vmem_bytes()
    num_cores = _num_tensorcores()

    # --- VMEM accounting (all double-buffered by the BlockSpec pipeline) ---
    if method == 'dot':
        const_bytes = 0
        extra_f32_blocks = 1        # possible materialized broadcast-multiply product
    elif method == 'general':
        const_bytes = 2 * (H * H + H) * itemsize
        extra_f32_blocks = 1
    else:  # concat
        const_bytes = 2 * (2 * H * H + 2 * H) * itemsize
        extra_f32_blocks = 3        # e_proj + energy (+ slack) f32 intermediates

    per_row = (2 * (S * H + H) * itemsize      # enc + hidden double-buffers
               + 2 * S * out_item              # output double-buffer
               + extra_f32_blocks * S * H * 4)  # f32 compute intermediates
    cap = (physical_vmem * 3) // 4             # leave headroom vs physical VMEM
    vmem_target = min(cap, 96 * 1024 * 1024)

    tb = _choose_tb(B, per_row, const_bytes, vmem_target, num_cores)
    grid = (pl.cdiv(B, tb),)

    needed = tb * per_row + const_bytes + (4 << 20)          # + compiler headroom
    vmem_limit = int(min(cap, max(needed, min(32 << 20, cap))))

    cparams = pltpu.CompilerParams(
        dimension_semantics=("parallel",),
        vmem_limit_bytes=vmem_limit,
    )

    h_spec = pl.BlockSpec((tb, H), lambda i: (i, 0))
    e_spec = pl.BlockSpec((tb, S, H), lambda i: (i, 0, 0))
    # Output block (tb, S): lane-dense whenever S % 128 == 0 (see header note
    # for why we do not pad unaligned S).
    o_spec = pl.BlockSpec((tb, S), lambda i: (i, 0))
    out_shape = jax.ShapeDtypeStruct((B, S), out_dtype)

    def const_spec(arr):  # small parameter array, same block every step
        return pl.BlockSpec(arr.shape, lambda i: (0, 0))

    if method == 'dot':
        out = pl.pallas_call(
            _make_dot_kernel(), out_shape=out_shape, grid=grid,
            in_specs=[h_spec, e_spec], out_specs=o_spec,
            compiler_params=cparams,
        )(h2, enc)
    elif method == 'general':
        W = params['Wa_w'].astype(in_dtype)                # (H, H)  (out, in)
        b = params['Wa_b'].reshape(1, H).astype(in_dtype)
        out = pl.pallas_call(
            _make_general_kernel(mxu_dtype), out_shape=out_shape, grid=grid,
            in_specs=[h_spec, e_spec, const_spec(W), const_spec(b)],
            out_specs=o_spec, compiler_params=cparams,
        )(h2, enc, W, b)
    else:  # concat
        Wt = params['Wa_w'].T.astype(in_dtype)             # (2H, H): split in-kernel
        b = params['Wa_b'].reshape(1, H).astype(in_dtype)
        v = params['v'].reshape(1, H).astype(in_dtype)
        out = pl.pallas_call(
            _make_concat_kernel(mxu_dtype), out_shape=out_shape, grid=grid,
            in_specs=[h_spec, e_spec, const_spec(Wt), const_spec(b), const_spec(v)],
            out_specs=o_spec, compiler_params=cparams,
        )(h2, enc, Wt, b, v)

    return out[:, None, :]                    # (B, 1, S)


# ---------------------------------------------------------- pure-JAX reference

def luong_attention_ref(method, hidden, enc, params=None):
    if method == 'dot':
        score = jnp.sum(hidden * enc, axis=2)
    elif method == 'general':
        energy = enc @ params['Wa_w'].T + params['Wa_b']
        score = jnp.sum(hidden * energy, axis=2)
    else:
        cat = jnp.concatenate([jnp.broadcast_to(hidden, enc.shape), enc], axis=2)
        energy = jnp.tanh(cat @ params['Wa_w'].T + params['Wa_b'])
        score = jnp.sum(params['v'] * energy, axis=2)
    return jax.nn.softmax(score, axis=1)[:, None, :]


# ---------------------------------------------------------------------- main

if __name__ == "__main__":
    key = jax.random.PRNGKey(0)

    # Small config (matches the module's expected shapes) plus a larger one
    # that exercises the batch-tiled, multi-step grid path.
    for (B, S, H) in [(2, 8, 32), (16, 128, 64)]:
        key, k_h, k_e, k_w1, k_b1, k_w2, k_b2, k_v = jax.random.split(key, 8)

        hidden = jax.random.normal(k_h, (B, 1, H), dtype=jnp.float32)
        encoder_output = jax.random.normal(k_e, (B, S, H), dtype=jnp.float32)

        # Deterministic synthetic parameters (nn.Linear conventions: (out, in)).
        params_general = {
            'Wa_w': jax.random.normal(k_w1, (H, H), dtype=jnp.float32) * 0.1,
            'Wa_b': jax.random.normal(k_b1, (H,), dtype=jnp.float32) * 0.1,
        }
        params_concat = {
            'Wa_w': jax.random.normal(k_w2, (H, 2 * H), dtype=jnp.float32) * 0.1,
            'Wa_b': jax.random.normal(k_b2, (H,), dtype=jnp.float32) * 0.1,
            'v': jax.random.normal(k_v, (1, H), dtype=jnp.float32) * 0.1,
        }

        cases = [
            ('dot', None),
            ('general', params_general),
            ('concat', params_concat),
        ]

        for method, params in cases:
            ref = luong_attention_ref(method, hidden, encoder_output, params)

            # Exact path (f32 MXU operands): tight tolerance vs the reference.
            out = luong_attention(method, hidden, encoder_output, params,
                                  mxu_bf16=False)
            out = jax.block_until_ready(out)
            assert out.shape == (B, 1, S), (method, out.shape)
            assert jnp.allclose(out, ref, atol=1e-5, rtol=1e-5), (method, B, S, H)
            assert jnp.allclose(jnp.sum(out, axis=-1), 1.0, atol=1e-5), method

            # Fast path (bf16 MXU operands, f32 accumulation): operand-rounding
            # error on the score feeds softmax, so bound it loosely in absolute
            # weight space and re-check normalization.
            out_fast = luong_attention(method, hidden, encoder_output, params)
            out_fast = jax.block_until_ready(out_fast)
            assert out_fast.shape == (B, 1, S), (method, out_fast.shape)
            assert bool(jnp.all(jnp.isfinite(out_fast))), method
            assert jnp.allclose(out_fast, ref, atol=5e-2), (method, B, S, H)
            assert jnp.allclose(jnp.sum(out_fast, axis=-1), 1.0, atol=1e-3), method

    print("KERNEL_OK")
</pallas_src>

<mosaic_0001>
module attributes {stable_mosaic.version = 11 : i64} {
  func.func @kernel(%arg0: i32, %arg1: memref<2x32xf32, #tpu.memory_space<vmem>>, %arg2: memref<2x8x32xf32, #tpu.memory_space<vmem>>, %arg3: memref<2x8xf32, #tpu.memory_space<vmem>>) attributes {dimension_semantics = [#tpu.dimension_semantics<parallel>], iteration_bounds = array<i64: 1>, scalar_prefetch = 0 : i64, scratch_operands = 0 : i64, tpu.core_type = #tpu.core_type<tc>, window_params = [{transform_indices = @transform_0, window_bounds = array<i64: 2, 32>}, {transform_indices = @transform_1, window_bounds = array<i64: 2, 8, 32>}, {transform_indices = @transform_2, window_bounds = array<i64: 2, 8>}]} {
    %c0 = arith.constant 0 : index
    %c0_0 = arith.constant 0 : index
    %0 = vector.load %arg1[%c0, %c0_0] : memref<2x32xf32, #tpu.memory_space<vmem>>, vector<2x32xf32>
    %c0_1 = arith.constant 0 : index
    %c0_2 = arith.constant 0 : index
    %c0_3 = arith.constant 0 : index
    %1 = vector.load %arg2[%c0_1, %c0_2, %c0_3] : memref<2x8x32xf32, #tpu.memory_space<vmem>>, vector<2x8x32xf32>
    %2 = vector.shape_cast %0 : vector<2x32xf32> to vector<2x1x32xf32>
    %3 = vector.broadcast %2 : vector<2x1x32xf32> to vector<2x8x32xf32>
    %4 = arith.mulf %3, %1 : vector<2x8x32xf32>
    %cst = arith.constant dense<0.000000e+00> : vector<2x8xf32>
    %5 = vector.multi_reduction <add>, %4, %cst [2] : vector<2x8x32xf32> to vector<2x8xf32>
    %cst_4 = arith.constant dense<0xFF800000> : vector<2xf32>
    %6 = vector.multi_reduction <maximumf>, %5, %cst_4 [1] : vector<2x8xf32> to vector<2xf32>
    %7 = vector.shape_cast %6 : vector<2xf32> to vector<2x1xf32>
    %8 = vector.broadcast %7 : vector<2x1xf32> to vector<2x8xf32>
    %9 = arith.subf %5, %8 : vector<2x8xf32>
    %10 = math.exp %9 : vector<2x8xf32>
    %cst_5 = arith.constant dense<0.000000e+00> : vector<2xf32>
    %11 = vector.multi_reduction <add>, %10, %cst_5 [1] : vector<2x8xf32> to vector<2xf32>
    %12 = vector.shape_cast %11 : vector<2xf32> to vector<2x1xf32>
    %13 = tpu.reciprocal %12 {approx = true} : vector<2x1xf32> -> vector<2x1xf32>
    %14 = arith.mulf %12, %13 : vector<2x1xf32>
    %cst_6 = arith.constant 2.000000e+00 : f32
    %15 = vector.broadcast %cst_6 : f32 to vector<2x1xf32>
    %16 = arith.subf %15, %14 : vector<2x1xf32>
    %17 = arith.mulf %13, %16 : vector<2x1xf32>
    %18 = vector.broadcast %17 : vector<2x1xf32> to vector<2x8xf32>
    %19 = arith.mulf %10, %18 : vector<2x8xf32>
    %c0_7 = arith.constant 0 : index
    %c0_8 = arith.constant 0 : index
    %20 = vector.load %arg3[%c0_7, %c0_8] : memref<2x8xf32, #tpu.memory_space<vmem>>, vector<2x8xf32>
    tpu.vector_store %arg3[%c0_7, %c0_8], %19 {strides = array<i32>} : memref<2x8xf32, #tpu.memory_space<vmem>>, vector<2x8xf32>,
    return
  }
  func.func @transform_0(%arg0: i32) -> (i32, i32) {
    %c0_i32 = arith.constant 0 : i32
    %c0_i32_0 = arith.constant 0 : i32
    return %arg0, %c0_i32 : i32, i32
  }
  func.func @transform_1(%arg0: i32) -> (i32, i32, i32) {
    %c0_i32 = arith.constant 0 : i32
    %c0_i32_0 = arith.constant 0 : i32
    %c0_i32_1 = arith.constant 0 : i32
    return %arg0, %c0_i32, %c0_i32_0 : i32, i32, i32
  }
  func.func @transform_2(%arg0: i32) -> (i32, i32) {
    %c0_i32 = arith.constant 0 : i32
    %c0_i32_0 = arith.constant 0 : i32
    return %arg0, %c0_i32 : i32, i32
  }
}

</mosaic_0001>

<llo_original>
// kernel: tpu_custom_call.1
$region0: #{tpu_custom_call.1}
  #allocation0 [shape = 'u32[]', space=smem, size = 0x4, offset = 0x4, fixed_abs, tag = 'smem constant byte address 0x4 - core index']
  #allocation1 [shape = 'u32[144,128]{1,0:T(1,128)}', space=vmem, size = 0x12000, scoped, tag = 'internal scratch']
  %s0 = inlined_call_operand.hbm [shape: f32[2,32], index: 0, kind: input, shape index: {}]
  %s1 = inlined_call_operand.hbm [shape: f32[2,8,32], index: 1, kind: input, shape index: {}]
  %s2 = inlined_call_operand.hbm [shape: f32[2,8], index: 2, kind: output, shape index: {}]
  %s3 = sld [smem:[#allocation0]]
  $region26: #{tpu_custom_call.1} parent=0
    _
  %s5 = ssub.s32 1, %s3
  %s6 = scalar_select 0, %s5, %s3
  $region1: #{tpu_custom_call.1} parent=0
    #allocation2 [shape = 'u8[1024]{0}', space=vmem, size = 0x400, scoped, tag = 'input window, operand 0, single buffered']
    #allocation3 [shape = 's32[1]{0}', space=sflag, size = 0x4, scoped, tag = 'scoped memory for tpu_custom_call.1']
    #allocation4 [shape = 's32[1]{0}', space=sflag, size = 0x4, scoped, tag = 'scoped memory for tpu_custom_call.1']
    #allocation5 [shape = 'u8[8192]{0}', space=vmem, size = 0x2000, scoped, tag = 'input window, operand 1, single buffered']
    #allocation6 [shape = 's32[1]{0}', space=sflag, size = 0x4, scoped, tag = 'scoped memory for tpu_custom_call.1']
    #allocation7 [shape = 'u8[1024]{0}', space=vmem, size = 0x400, scoped, tag = 'output window, operand 0, single buffered']
    %7 = vsyncpa [#allocation3], 0
    %8 = vsyncpa [#allocation6], 0
    %9 = vsyncpa [#allocation4], 0
    // Predicated region
    $region2: #{tpu_custom_call.1} parent=1 // pred_check
      _
    $region3: #{tpu_custom_call.1} parent=1 // pred_check_branch
      %11 = sbr.rel (0) target = $region5
    $region4: #{tpu_custom_call.1} parent=1 // pred_region
      %s13 = ssub.s32 32, 32
      %14 = vsyncadd [#allocation3], %s13
      %s16 = sshll.u32 [#allocation2], 4
      %s17 = int_to_ptr.vmem [resolvable:$true] %s16
      %19 = dma.hbm_to_vmem [thread:$0]  %s0, 32, %s17, [#allocation3]
    $region5: #{tpu_custom_call.1} parent=1 // pred_fallthru
      _
    // Predicated region
    $region6: #{tpu_custom_call.1} parent=1 // pred_check
      _
    $region7: #{tpu_custom_call.1} parent=1 // pred_check_branch
      %21 = sbr.rel (0) target = $region9
    $region8: #{tpu_custom_call.1} parent=1 // pred_region
      %s23 = ssub.s32 256, 256
      %24 = vsyncadd [#allocation6], %s23
      %s25 = sshll.u32 [#allocation5], 4
      %s26 = int_to_ptr.vmem [resolvable:$true] %s25
      %31 = dma.hbm_to_vmem [thread:$0]  %s1, 256, %s26, [#allocation6], 128, 128, 8
    $region9: #{tpu_custom_call.1} parent=1 // pred_fallthru
      _
    // Predicated region
    $region10: #{tpu_custom_call.1} parent=1 // pred_check
      _
    $region11: #{tpu_custom_call.1} parent=1 // pred_check_branch
      %33 = sbr.rel (0) target = $region13
    $region12: #{tpu_custom_call.1} parent=1 // pred_region
      %34 = dma.done [#allocation3], 32
    $region13: #{tpu_custom_call.1} parent=1 // pred_fallthru
      _
    // Predicated region
    $region14: #{tpu_custom_call.1} parent=1 // pred_check
      _
    $region15: #{tpu_custom_call.1} parent=1 // pred_check_branch
      %36 = sbr.rel (0) target = $region17
    $region16: #{tpu_custom_call.1} parent=1 // pred_region
      %37 = dma.done [#allocation6], 256
    $region17: #{tpu_custom_call.1} parent=1 // pred_fallthru
      _
    %v38 = vld [vmem:[#allocation2] sm:$0x3]
    %v39 = vld [vmem:[#allocation5] sm:$0xff]
    %v40 = vld [vmem:[#allocation5 + $0x8] sm:$0xff]
    %v43 = vunpack.c.l.s4 1966171168
    %v44 = vunpack.c.0.s8 %v43
    %v45 = vlaneseq
    %v46 = vshrl.u32 %v45, 7
    %v47 = vsub.s32 %v44, %v46
    %v48 = vrot.slane %v38, %v47
    %v49 = vcombine.high %v48, %v48
    %v51 = vunpack.c.l.s4 1966171168
    %v52 = vunpack.c.0.s8 %v51
    %v53 = vlaneseq
    %v54 = vshrl.u32 %v53, 7
    %v55 = vsub.s32 %v52, %v54
    %v56 = vrot.slane %v48, %v55
    %v58 = vunpack.c.l.s4 1966171168
    %v59 = vunpack.c.0.s8 %v58
    %v60 = vlaneseq
    %v61 = vshrl.u32 %v60, 7
    %v62 = vsub.s32 %v59, %v61
    %v63 = vrot.slane %v49, %v62
    %v64 = vlaneseq
    %v65 = vshrl.u32 %v64, 7
    %v66 = vsub.s32 0, %v65
    %v67 = vrot.slane %v56, %v66
    %v68 = vlaneseq
    %v69 = vshrl.u32 %v68, 7
    %v70 = vsub.s32 0, %v69
    %v71 = vrot.slane %v63, %v70
    %v74 = vmul.f32 %v67, %v39
    %v75 = vmul.f32 %v71, %v40
    %vm76 = vcmask 261120
    %v77 = vsel %vm76, %v74, 0.0
    %78 = vadd.xlane.f32.xlu0 %v77
    %v79 = vpop.xlane.xlu0 %78
    %v80 = vsel %vm76, %v75, 0.0
    %81 = vadd.xlane.f32.xlu0 %v80
    %v82 = vpop.xlane.xlu0 %81
    %v85 = vlaneseq
    %v86 = vand.u32 %v85, 127
    %v87 = vlaneseq
    %v88 = vshrl.u32 %v87, 7
    %v89 = vsub.s32 %v86, %v88
    %v90 = vrot.slane %v79, %v89
    %v91 = vlaneseq
    %v92 = vshrl.u32 %v91, 7
    %v93 = vsub.s32 %v86, %v92
    %v94 = vrot.slane %v82, %v93
    %vm95 = vcmask 1041409
    %v96 = vsel %vm95, %v94, %v90
    %vm98 = vcmask 58368
    %v99 = vsel %vm98, %v96, -inf
    %100 = vmax.xlane.f32.xlu0 %v99
    %v101 = vpop.xlane.xlu0 %100
    %v103 = vlaneseq
    %v104 = vshrl.u32 %v103, 7
    %v105 = vsub.s32 0, %v104
    %v106 = vrot.slane %v101, %v105
    %v107 = vlaneseq
    %v108 = vshrl.u32 %v107, 7
    %v109 = vsub.s32 1, %v108
    %v110 = vrot.slane %v101, %v109
    %v113 = vsub.f32 %v79, %v106
    %v114 = vsub.f32 %v82, %v110
    %v115 = vmul.f32 %v113, 1.442695
    %v116 = vpow.pop %v115
    %v117 = vmul.f32 %v114, 1.442695
    %v118 = vpow.pop %v117
    %121 = vset.pattern.permute.xlu0 0
    %122 = vperm.xlu0 %121, %v116
    %v123 = vpop.permute.xlu0 %122
    %124 = vset.pattern.permute.xlu0 0
    %125 = vperm.xlu0 %124, %v118
    %v126 = vpop.permute.xlu0 %125
    %v127 = vlaneseq
    %v128 = vshrl.u32 %v127, 7
    %v129 = vsub.s32 %v86, %v128
    %v130 = vrot.slane %v123, %v129
    %v131 = vlaneseq
    %v132 = vshrl.u32 %v131, 7
    %v133 = vsub.s32 %v86, %v132
    %v134 = vrot.slane %v126, %v133
    %v135 = vsel %vm95, %v134, %v130
    %v137 = vsel %vm98, %v135, 0.0
    %138 = vadd.xlane.f32.xlu0 %v137
    %v139 = vpop.xlane.xlu0 %138
    %v140 = vrcp.pop %v139
    %v141 = vmul.f32 %v139, %v140
    %v142 = vsub.f32 2.0, %v141
    %v143 = vmul.f32 %v140, %v142
    %v145 = vlaneseq
    %v146 = vshrl.u32 %v145, 7
    %v147 = vsub.s32 0, %v146
    %v148 = vrot.slane %v143, %v147
    %v149 = vlaneseq
    %v150 = vshrl.u32 %v149, 7
    %v151 = vsub.s32 1, %v150
    %v152 = vrot.slane %v143, %v151
    %v155 = vmul.f32 %v116, %v148
    %v156 = vmul.f32 %v118, %v152
    %159 = vset.pattern.permute.xlu0 0
    %160 = vperm.xlu0 %159, %v155
    %v161 = vpop.permute.xlu0 %160
    %162 = vset.pattern.permute.xlu0 0
    %163 = vperm.xlu0 %162, %v156
    %v164 = vpop.permute.xlu0 %163
    %v165 = vlaneseq
    %v166 = vshrl.u32 %v165, 7
    %v167 = vsub.s32 %v86, %v166
    %v168 = vrot.slane %v161, %v167
    %v169 = vlaneseq
    %v170 = vshrl.u32 %v169, 7
    %v171 = vsub.s32 %v86, %v170
    %v172 = vrot.slane %v164, %v171
    %v173 = vsel %vm95, %v172, %v168
    %175 = vst.msk [vmem:[#allocation7] sm:$0x3] %vm98, %v173
    // Predicated region
    $region18: #{tpu_custom_call.1} parent=1 // pred_check
      _
    $region19: #{tpu_custom_call.1} parent=1 // pred_check_branch
      %177 = sbr.rel (0) target = $region21
    $region20: #{tpu_custom_call.1} parent=1 // pred_region
      %s179 = ssub.s32 32, 32
      %180 = vsyncadd [#allocation4], %s179
      %s182 = sshll.u32 [#allocation7], 4
      %s183 = int_to_ptr.vmem [resolvable:$true] %s182
      %185 = dma.vmem_to_hbm [thread:$0]  %s183, 32, %s2, [#allocation4]
    $region21: #{tpu_custom_call.1} parent=1 // pred_fallthru
      _
    // Predicated region
    $region22: #{tpu_custom_call.1} parent=1 // pred_check
      _
    $region23: #{tpu_custom_call.1} parent=1 // pred_check_branch
      %187 = sbr.rel (0) target = $region25
    $region24: #{tpu_custom_call.1} parent=1 // pred_region
      %188 = dma.done [#allocation4], 32
    $region25: #{tpu_custom_call.1} parent=1 // pred_fallthru
      _
    %189 = vsyncpa [#allocation3], 1
    %190 = vsyncpa [#allocation6], 1
    %191 = vsyncpa [#allocation4], 1

</llo_original>
